<compile_context>
chip_gen: v6e
topology: v6e:2x2x1
jax: 0.10.0
libtpu: 0.0.40
codegen_flags: <defaults>
</compile_context>

<pallas_src>
import jax
import jax.numpy as jnp
from jax.experimental import pallas as pl
from jax.experimental.pallas import tpu as pltpu


def _mlp_kernel(x_ref, w1_ref, b1_ref, w2_ref, b2_ref, o_ref):
    # fc1 + ReLU: MXU matmul with f32 accumulation, epilogue on the VPU.
    h = jnp.dot(x_ref[...], w1_ref[...], preferred_element_type=jnp.float32)
    h = jnp.maximum(h + b1_ref[...], 0.0)                      # (TB, H)

    # fc2 (single output feature): VPU multiply + XLU lane-reduction instead
    # of an MXU (H,1) matmul (which would use 1/128..1/256 of the MXU lanes
    # and pay push/pop latency for a dot product).
    o = jnp.sum(h * w2_ref[...], axis=-1) + b2_ref[0]          # (TB,)

    # Lane-dense store: output block is (1, 1, TB), TB along the lane axis.
    o_ref[0, 0, :] = jax.nn.sigmoid(o).astype(o_ref.dtype)


def feedforward(x, w1, b1, w2, b2, *, block_b=256):
    """out = sigmoid(relu(x @ w1 + b1) @ w2.T + b2)

    x:  [B, D_in]
    w1: [D_in, H]   (torch fc1.weight transposed)
    b1: [1, H]
    w2: [1, H]      (torch fc2.weight layout; single output feature)
    b2: [1]         (scalar bias; routed through SMEM)
    returns [B, 1]
    """
    B, D_in = x.shape
    H = w1.shape[1]

    # Batch tiling: one grid step per TB rows of x. Weight index_maps are
    # constant so W1 / b1 / W2 are fetched once and stay resident in VMEM.
    if B <= block_b:
        tb = B                       # single full-extent block (no padding needed)
        n_tiles = 1
        x_pad = x
    else:
        tb = block_b                 # 256-row tiles (MXU-aligned on all chips)
        n_tiles = -(-B // tb)
        x_pad = jnp.pad(x, ((0, n_tiles * tb - B), (0, 0)))

    out = pl.pallas_call(
        _mlp_kernel,
        out_shape=jax.ShapeDtypeStruct((n_tiles, 1, tb), x.dtype),
        grid=(n_tiles,),
        in_specs=[
            pl.BlockSpec((tb, D_in), lambda i: (i, 0)),          # x tile (pipelined)
            pl.BlockSpec((D_in, H), lambda i: (0, 0)),           # W1 (resident)
            pl.BlockSpec((1, H), lambda i: (0, 0)),              # b1 (resident)
            pl.BlockSpec((1, H), lambda i: (0, 0)),              # W2 row (resident)
            pl.BlockSpec(memory_space=pltpu.MemorySpace.SMEM),   # b2 scalar in SMEM
        ],
        out_specs=pl.BlockSpec((1, 1, tb), lambda i: (i, 0, 0)),
        compiler_params=pltpu.CompilerParams(
            # Independent batch tiles -> shardable across TCs on v7x megacore.
            dimension_semantics=("parallel",),
        ),
    )(x_pad, w1, b1, w2, b2)

    return out.reshape(-1)[:B].reshape(B, 1)


def init_params(key, input_size, hidden_size, dtype=jnp.float32):
    """Synthetic parameters matching nn.Linear init scale."""
    k1, k2, k3, k4 = jax.random.split(key, 4)
    s1 = 1.0 / (input_size ** 0.5)
    s2 = 1.0 / (hidden_size ** 0.5)
    w1 = jax.random.uniform(k1, (input_size, hidden_size), dtype, -s1, s1)
    b1 = jax.random.uniform(k2, (1, hidden_size), dtype, -s1, s1)
    w2 = jax.random.uniform(k3, (1, hidden_size), dtype, -s2, s2)   # fc2.weight layout
    b2 = jax.random.uniform(k4, (1,), dtype, -s2, s2)
    return w1, b1, w2, b2


def _reference(x, w1, b1, w2, b2):
    return jax.nn.sigmoid(jnp.maximum(x @ w1 + b1, 0.0) @ w2.T + b2)


if __name__ == "__main__":
    key = jax.random.PRNGKey(0)
    kx, kp, kx2 = jax.random.split(key, 3)

    input_size, hidden_size = 16, 32
    w1, b1, w2, b2 = init_params(kp, input_size, hidden_size)

    # Small case: single full-extent block (grid of 1).
    batch = 8
    x = jax.random.normal(kx, (batch, input_size), dtype=jnp.float32)
    out = jax.block_until_ready(feedforward(x, w1, b1, w2, b2))
    ref = _reference(x, w1, b1, w2, b2)
    assert out.shape == (batch, 1)
    assert jnp.allclose(out, ref, atol=1e-5, rtol=1e-5)

    # Larger case: exercises the tiled / padded batch path (2 x 256-row tiles).
    batch2 = 300
    x2 = jax.random.normal(kx2, (batch2, input_size), dtype=jnp.float32)
    out2 = jax.block_until_ready(feedforward(x2, w1, b1, w2, b2))
    ref2 = _reference(x2, w1, b1, w2, b2)
    assert out2.shape == (batch2, 1)
    assert jnp.allclose(out2, ref2, atol=1e-5, rtol=1e-5)

    print("KERNEL_OK")
</pallas_src>

<mosaic_0001>
module attributes {stable_mosaic.version = 11 : i64} {
  func.func @_mlp_kernel(%arg0: i32, %arg1: memref<8x16xf32, #tpu.memory_space<vmem>>, %arg2: memref<16x32xf32, #tpu.memory_space<vmem>>, %arg3: memref<1x32xf32, #tpu.memory_space<vmem>>, %arg4: memref<1x32xf32, #tpu.memory_space<vmem>>, %arg5: memref<1xf32, #tpu.memory_space<smem>>, %arg6: memref<1x1x8xf32, #tpu.memory_space<vmem>>) attributes {dimension_semantics = [#tpu.dimension_semantics<parallel>], iteration_bounds = array<i64: 1>, scalar_prefetch = 0 : i64, scratch_operands = 0 : i64, tpu.core_type = #tpu.core_type<tc>, window_params = [{transform_indices = @transform_0, window_bounds = array<i64: 8, 16>}, {pipeline_mode = #tpu.pipeline_mode<synchronous>, transform_indices = @transform_1, window_bounds = array<i64: 16, 32>}, {pipeline_mode = #tpu.pipeline_mode<synchronous>, transform_indices = @transform_2, window_bounds = array<i64: 1, 32>}, {pipeline_mode = #tpu.pipeline_mode<synchronous>, transform_indices = @transform_3, window_bounds = array<i64: 1, 32>}, {transform_indices = @transform_4, window_bounds = array<i64: 1>}, {transform_indices = @transform_5, window_bounds = array<i64: 1, 1, 8>}]} {
    %c0 = arith.constant 0 : index
    %c0_0 = arith.constant 0 : index
    %0 = vector.load %arg1[%c0, %c0_0] : memref<8x16xf32, #tpu.memory_space<vmem>>, vector<8x16xf32>
    %c0_1 = arith.constant 0 : index
    %c0_2 = arith.constant 0 : index
    %1 = vector.load %arg2[%c0_1, %c0_2] : memref<16x32xf32, #tpu.memory_space<vmem>>, vector<16x32xf32>
    %cst = arith.constant dense<0.000000e+00> : vector<8x32xf32>
    %2 = tpu.matmul %0, %1, %cst {dimension_numbers = #tpu.dot_dimension_numbers<[1], [0], [0], [1], [0, 0, 1, 1], [], []>} : vector<8x16xf32>, vector<16x32xf32>, vector<8x32xf32> -> vector<8x32xf32>
    %c0_3 = arith.constant 0 : index
    %c0_4 = arith.constant 0 : index
    %3 = vector.load %arg3[%c0_3, %c0_4] : memref<1x32xf32, #tpu.memory_space<vmem>>, vector<1x32xf32>
    %4 = vector.broadcast %3 : vector<1x32xf32> to vector<8x32xf32>
    %5 = arith.addf %2, %4 : vector<8x32xf32>
    %cst_5 = arith.constant 0.000000e+00 : f32
    %6 = vector.broadcast %cst_5 : f32 to vector<8x32xf32>
    %7 = arith.maximumf %5, %6 : vector<8x32xf32>
    %c0_6 = arith.constant 0 : index
    %c0_7 = arith.constant 0 : index
    %8 = vector.load %arg4[%c0_6, %c0_7] : memref<1x32xf32, #tpu.memory_space<vmem>>, vector<1x32xf32>
    %9 = vector.broadcast %8 : vector<1x32xf32> to vector<8x32xf32>
    %10 = arith.mulf %7, %9 : vector<8x32xf32>
    %cst_8 = arith.constant dense<0.000000e+00> : vector<8xf32>
    %11 = vector.multi_reduction <add>, %10, %cst_8 [1] : vector<8x32xf32> to vector<8xf32>
    %c0_9 = arith.constant 0 : index
    %12 = memref.load %arg5[%c0_9] : memref<1xf32, #tpu.memory_space<smem>>
    %13 = vector.broadcast %12 : f32 to vector<8xf32>
    %14 = arith.addf %11, %13 : vector<8xf32>
    %15 = arith.negf %14 : vector<8xf32>
    %16 = math.exp %15 : vector<8xf32>
    %cst_10 = arith.constant 1.000000e+00 : f32
    %17 = vector.broadcast %cst_10 : f32 to vector<8xf32>
    %18 = arith.addf %17, %16 : vector<8xf32>
    %19 = arith.divf %17, %18 : vector<8xf32>
    %c0_11 = arith.constant 0 : index
    %c0_12 = arith.constant 0 : index
    %c0_13 = arith.constant 0 : index
    %20 = vector.load %arg6[%c0_11, %c0_12, %c0_13] : memref<1x1x8xf32, #tpu.memory_space<vmem>>, vector<1x1x8xf32>
    %21 = vector.shape_cast %20 : vector<1x1x8xf32> to vector<8xf32>
    %22 = vector.shape_cast %19 : vector<8xf32> to vector<1x1x8xf32>
    tpu.vector_store %arg6[%c0_11, %c0_12, %c0_13], %22 {strides = array<i32>} : memref<1x1x8xf32, #tpu.memory_space<vmem>>, vector<1x1x8xf32>,
    return
  }
  func.func @transform_0(%arg0: i32) -> (i32, i32) {
    %c0_i32 = arith.constant 0 : i32
    %c0_i32_0 = arith.constant 0 : i32
    return %arg0, %c0_i32 : i32, i32
  }
  func.func @transform_1(%arg0: i32) -> (i32, i32) {
    %c0_i32 = arith.constant 0 : i32
    %c0_i32_0 = arith.constant 0 : i32
    %c0_i32_1 = arith.constant 0 : i32
    return %c0_i32, %c0_i32_0 : i32, i32
  }
  func.func @transform_2(%arg0: i32) -> (i32, i32) {
    %c0_i32 = arith.constant 0 : i32
    %c0_i32_0 = arith.constant 0 : i32
    %c0_i32_1 = arith.constant 0 : i32
    return %c0_i32, %c0_i32_0 : i32, i32
  }
  func.func @transform_3(%arg0: i32) -> (i32, i32) {
    %c0_i32 = arith.constant 0 : i32
    %c0_i32_0 = arith.constant 0 : i32
    %c0_i32_1 = arith.constant 0 : i32
    return %c0_i32, %c0_i32_0 : i32, i32
  }
  func.func @transform_4(%arg0: i32) -> i32 {
    %c0_i32 = arith.constant 0 : i32
    %c0_i32_0 = arith.constant 0 : i32
    return %c0_i32 : i32
  }
  func.func @transform_5(%arg0: i32) -> (i32, i32, i32) {
    %c0_i32 = arith.constant 0 : i32
    %c0_i32_0 = arith.constant 0 : i32
    %c0_i32_1 = arith.constant 0 : i32
    return %arg0, %c0_i32, %c0_i32_0 : i32, i32, i32
  }
}

</mosaic_0001>

<llo_original>
// kernel: tpu_custom_call.1
$region0: #{tpu_custom_call.1}
  #allocation0 [shape = 'u32[]', space=smem, size = 0x4, offset = 0x4, fixed_abs, tag = 'smem constant byte address 0x4 - core index']
  #allocation1 [shape = 'u32[144,128]{1,0:T(1,128)}', space=vmem, size = 0x12000, scoped, tag = 'internal scratch']
  #allocation2 [shape = 'f32[1]{0:T(128)S(6)}', space=smem, size = 0x200, scoped, tag = 'scoped memory for tpu_custom_call.1']
  %s0 = inlined_call_operand.hbm [shape: f32[8,16], index: 0, kind: input, shape index: {}]
  %s1 = inlined_call_operand.hbm [shape: f32[16,32], index: 1, kind: input, shape index: {}]
  %s2 = inlined_call_operand.vmem [shape: f32[1,32], index: 2, kind: input, shape index: {}]
  %s3 = inlined_call_operand.vmem [shape: f32[1,32], index: 3, kind: input, shape index: {}]
  %s4 = inlined_call_operand.<no memory space> [shape: f32[1], index: 4, kind: input, shape index: {}]
  %s5 = inlined_call_operand.hbm [shape: f32[1,1,8], index: 5, kind: output, shape index: {}]
  %s6 = sld [smem:[#allocation0]]
  $region38: #{tpu_custom_call.1} parent=0
    _
  %s8 = ssub.s32 1, %s6
  %s9 = scalar_select 0, %s8, %s6
  %10 = sst [smem:[#allocation2]] %s4
  $region1: #{tpu_custom_call.1} parent=0
    #allocation3 [shape = 'u8[4096]{0}', space=vmem, size = 0x1000, scoped, tag = 'input window, operand 0, single buffered']
    #allocation4 [shape = 's32[1]{0}', space=sflag, size = 0x4, scoped, tag = 'scoped memory for tpu_custom_call.1']
    #allocation5 [shape = 's32[1]{0}', space=sflag, size = 0x4, scoped, tag = 'scoped memory for tpu_custom_call.1']
    #allocation6 [shape = 'u8[8192]{0}', space=vmem, size = 0x2000, scoped, tag = 'input window, operand 1, single buffered']
    #allocation7 [shape = 's32[1]{0}', space=sflag, size = 0x4, scoped, tag = 'scoped memory for tpu_custom_call.1']
    #allocation8 [shape = 'u8[512]{0}', space=vmem, size = 0x400, scoped, tag = 'output window, operand 0, single buffered']
    %11 = vsyncpa [#allocation4], 0
    %12 = vsyncpa [#allocation7], 0
    %13 = vsyncpa [#allocation5], 0
    // Predicated region
    $region2: #{tpu_custom_call.1} parent=1 // pred_check
      _
    $region3: #{tpu_custom_call.1} parent=1 // pred_check_branch
      %15 = sbr.rel (0) target = $region5
    $region4: #{tpu_custom_call.1} parent=1 // pred_region
      %s17 = ssub.s32 128, 128
      %18 = vsyncadd [#allocation4], %s17
      %s20 = sshll.u32 [#allocation3], 4
      %s21 = int_to_ptr.vmem [resolvable:$true] %s20
      %23 = dma.hbm_to_vmem [thread:$0]  %s0, 128, %s21, [#allocation4]
    $region5: #{tpu_custom_call.1} parent=1 // pred_fallthru
      _
    // Predicated region
    $region6: #{tpu_custom_call.1} parent=1 // pred_check
      _
    $region7: #{tpu_custom_call.1} parent=1 // pred_check_branch
      %25 = sbr.rel (0) target = $region9
    $region8: #{tpu_custom_call.1} parent=1 // pred_region
      %s27 = ssub.s32 256, 256
      %28 = vsyncadd [#allocation7], %s27
      %s29 = sshll.u32 [#allocation6], 4
      %s30 = int_to_ptr.vmem [resolvable:$true] %s29
      %35 = dma.hbm_to_vmem [thread:$0]  %s1, 256, %s30, [#allocation7], 128, 128, 8
    $region9: #{tpu_custom_call.1} parent=1 // pred_fallthru
      _
    // Predicated region
    $region10: #{tpu_custom_call.1} parent=1 // pred_check
      _
    $region11: #{tpu_custom_call.1} parent=1 // pred_check_branch
      %37 = sbr.rel (0) target = $region13
    $region12: #{tpu_custom_call.1} parent=1 // pred_region
      _
    $region13: #{tpu_custom_call.1} parent=1 // pred_fallthru
      _
    // Predicated region
    $region14: #{tpu_custom_call.1} parent=1 // pred_check
      _
    $region15: #{tpu_custom_call.1} parent=1 // pred_check_branch
      %39 = sbr.rel (0) target = $region17
    $region16: #{tpu_custom_call.1} parent=1 // pred_region
      _
    $region17: #{tpu_custom_call.1} parent=1 // pred_fallthru
      _
    // Predicated region
    $region18: #{tpu_custom_call.1} parent=1 // pred_check
      _
    $region19: #{tpu_custom_call.1} parent=1 // pred_check_branch
      %41 = sbr.rel (0) target = $region21
    $region20: #{tpu_custom_call.1} parent=1 // pred_region
      _
    $region21: #{tpu_custom_call.1} parent=1 // pred_fallthru
      _
    // Predicated region
    $region22: #{tpu_custom_call.1} parent=1 // pred_check
      _
    $region23: #{tpu_custom_call.1} parent=1 // pred_check_branch
      %43 = sbr.rel (0) target = $region25
    $region24: #{tpu_custom_call.1} parent=1 // pred_region
      %44 = dma.done [#allocation4], 128
    $region25: #{tpu_custom_call.1} parent=1 // pred_fallthru
      _
    // Predicated region
    $region26: #{tpu_custom_call.1} parent=1 // pred_check
      _
    $region27: #{tpu_custom_call.1} parent=1 // pred_check_branch
      %46 = sbr.rel (0) target = $region29
    $region28: #{tpu_custom_call.1} parent=1 // pred_region
      %47 = dma.done [#allocation7], 256
    $region29: #{tpu_custom_call.1} parent=1 // pred_fallthru
      _
    %v48 = vld [vmem:[#allocation3] sm:$0xff]
    %v49 = vld [vmem:[#allocation6] sm:$0xff]
    %v50 = vld [vmem:[#allocation6 + $0x8] sm:$0xff]
    %v51 = vld [vmem:[%s2] sm:$0x1]
    %v53 = vlaneseq
    %v54 = vshrl.u32 %v53, 7
    %v55 = vsub.s32 0, %v54
    %v56 = vrot.slane %v51, %v55
    %vm58 = vcmask 130048
    %v60 = vsel %vm58, %v48, 0
    %62 = vmatprep.subr.mxu0 0.0
    %63 = vmatpush1.msra.mxu0 0.0
    %64 = vmatprep.subr.mxu0 0.0
    %65 = vmatpush1.msra.mxu0 0.0
    %66 = vmatprep.subr.mxu0 0.0
    %67 = vmatpush1.msra.mxu0 0.0
    %68 = vmatprep.subr.mxu0 0.0
    %69 = vmatpush1.msra.mxu0 0.0
    %70 = vmatprep.subr.mxu0 0.0
    %71 = vmatpush1.msra.mxu0 0.0
    %72 = vmatprep.subr.mxu0 0.0
    %73 = vmatpush1.msra.mxu0 0.0
    %74 = vmatprep.subr.mxu0 0.0
    %75 = vmatpush1.msra.mxu0 0.0
    %76 = vmatprep.subr.mxu0 0.0
    %77 = vmatpush1.msra.mxu0 0.0
    %78 = vmatprep.subr.mxu0 0.0
    %79 = vmatpush1.msra.mxu0 0.0
    %80 = vmatprep.subr.mxu0 0.0
    %81 = vmatpush1.msra.mxu0 0.0
    %82 = vmatprep.subr.mxu0 0.0
    %83 = vmatpush1.msra.mxu0 0.0
    %84 = vmatprep.subr.mxu0 0.0
    %85 = vmatpush1.msra.mxu0 0.0
    %86 = vmatprep.subr.mxu0 0.0
    %87 = vmatpush1.msra.mxu0 0.0
    %88 = vmatprep.subr.mxu0 0.0
    %89 = vmatpush1.msra.mxu0 0.0
    %90 = vmatprep.subr.mxu0 0.0
    %91 = vmatpush1.msra.mxu0 %v50
    %92 = vmatprep.subr.mxu0 0.0
    %93 = vmatpush1.msra.mxu0 %v49
    %94 = vmatprep.subr.mxu0 0.0
    %95 = vmatpush2.msra.mxu0 0.0
    %96 = vmatprep.subr.mxu0 0.0
    %97 = vmatpush2.msra.mxu0 0.0
    %98 = vmatprep.subr.mxu0 0.0
    %99 = vmatpush2.msra.mxu0 0.0
    %100 = vmatprep.subr.mxu0 0.0
    %101 = vmatpush2.msra.mxu0 0.0
    %102 = vmatprep.subr.mxu0 0.0
    %103 = vmatpush2.msra.mxu0 0.0
    %104 = vmatprep.subr.mxu0 0.0
    %105 = vmatpush2.msra.mxu0 0.0
    %106 = vmatprep.subr.mxu0 0.0
    %107 = vmatpush2.msra.mxu0 0.0
    %108 = vmatprep.subr.mxu0 0.0
    %109 = vmatpush2.msra.mxu0 0.0
    %110 = vmatprep.subr.mxu0 0.0
    %111 = vmatpush2.msra.mxu0 0.0
    %112 = vmatprep.subr.mxu0 0.0
    %113 = vmatpush2.msra.mxu0 0.0
    %114 = vmatprep.subr.mxu0 0.0
    %115 = vmatpush2.msra.mxu0 0.0
    %116 = vmatprep.subr.mxu0 0.0
    %117 = vmatpush2.msra.mxu0 0.0
    %118 = vmatprep.subr.mxu0 0.0
    %119 = vmatpush2.msra.mxu0 0.0
    %120 = vmatprep.subr.mxu0 0.0
    %121 = vmatpush2.msra.mxu0 0.0
    %122 = vmatprep.subr.mxu0 0.0
    %123 = vmatpush2.msra.mxu0 0.0
    %124 = vmatprep.subr.mxu0 0.0
    %125 = vmatpush2.msra.mxu0 0.0
    %126 = vmatprep.mubr.f32.mxu0 0.0
    %127 = vmatmul.mubr.f32.gmra.mxu0 %v60
    %v128 = vpop.f32.mrf.mxu0
    %v129 = vadd.f32 %v56, %v128
    %v130 = vpop.f32.mrf.mxu0
    %131 = vdwg.mxu0
    %v132 = vmax.f32 %v129, 0.0
    %v133 = vld [vmem:[%s3] sm:$0x1]
    %v135 = vlaneseq
    %v136 = vshrl.u32 %v135, 7
    %v137 = vsub.s32 0, %v136
    %v138 = vrot.slane %v133, %v137
    %v140 = vmul.f32 %v132, %v138
    %vm141 = vcmask 261120
    %v142 = vsel %vm141, %v140, 0.0
    %143 = vadd.xlane.f32.xlu0 %v142
    %v144 = vpop.xlane.xlu0 %143
    %s145 = sld [smem:[#allocation2]]
    %v146 = vstv %s145
    %v147 = vadd.f32 %v144, %v146
    %v148 = vxor.u32 %v147, 2147483648
    %v149 = vmul.f32 %v148, 1.442695
    %v150 = vpow.pop %v149
    %v151 = vadd.f32 %v150, 1.0
    %v152 = vrcp.pop %v151
    %v153 = vmul.f32 1.0, %v152
    %v155 = vlaneseq
    %v156 = vand.u32 %v155, 127
    %v157 = vlaneseq
    %v158 = vshrl.u32 %v157, 7
    %v159 = vsub.s32 %v156, %v158
    %v160 = vrot.slane %v153, %v159
    %vm162 = vcmask 57344
    %163 = vst.msk [vmem:[#allocation8] sm:$0x1] %vm162, %v160
    // Predicated region
    $region30: #{tpu_custom_call.1} parent=1 // pred_check
      _
    $region31: #{tpu_custom_call.1} parent=1 // pred_check_branch
      %165 = sbr.rel (0) target = $region33
    $region32: #{tpu_custom_call.1} parent=1 // pred_region
      %s167 = ssub.s32 16, 16
      %168 = vsyncadd [#allocation5], %s167
      %s170 = sshll.u32 [#allocation8], 4
      %s171 = int_to_ptr.vmem [resolvable:$true] %s170
      %173 = dma.vmem_to_hbm [thread:$0]  %s171, 16, %s5, [#allocation5]
    $region33: #{tpu_custom_call.1} parent=1 // pred_fallthru
      _
    // Predicated region
    $region34: #{tpu_custom_call.1} parent=1 // pred_check
      _
    $region35: #{tpu_custom_call.1} parent=1 // pred_check_branch
      %175 = sbr.rel (0) target = $region37
    $region36: #{tpu_custom_call.1} parent=1 // pred_region
      %176 = dma.done [#allocation5], 16
    $region37: #{tpu_custom_call.1} parent=1 // pred_fallthru
      _
    %177 = vsyncpa [#allocation4], 1
    %178 = vsyncpa [#allocation7], 1
    %179 = vsyncpa [#allocation5], 1

</llo_original>
